<compile_context>
chip_gen: v7x
topology: tpu7x:2x2x1
jax: 0.10.0
libtpu: 0.0.40
codegen_flags: <defaults>
</compile_context>

<pallas_src>
import functools
import math

import jax
import jax.numpy as jnp
from jax import lax
from jax.experimental import pallas as pl
from jax.experimental.pallas import tpu as pltpu


_TWO_PI = float(2.0 * math.pi)
_TARGET_BLOCK_BYTES = 2 * 1024 * 1024   # ~2 MiB per pipelined block (v5e-safe)
_GOLDEN = -1640531527                   # 0x9E3779B9 as int32 (seed fold)
_REMIX = -2048144789                    # 0x85EBCA6B as int32 (2nd-stream remix)


def _lowbias32(v):
    """lowbias32 integer hash on int32 carriers.

    Logical shifts + wrapping mul/xor are bit-identical to the canonical
    uint32 formulation while avoiding unsigned dtypes entirely.
    """
    v = (v ^ lax.shift_right_logical(v, 16)) * jnp.int32(0x7FEB352D)
    v = (v ^ lax.shift_right_logical(v, 15)) * jnp.int32(-2073450869)  # 0x846CA68B
    v = v ^ lax.shift_right_logical(v, 16)
    return v


def _bits_to_unit(bits):
    """32 random bits (int32 carrier) -> f32 uniform in [0, 1).

    Mantissa bit-trick: 23 random bits into the mantissa of a float in [1, 2)
    and subtract 1 — a free bitcast instead of an int->float convert.
    """
    mant = lax.shift_right_logical(bits, 9) | jnp.int32(0x3F800000)
    return lax.bitcast_convert_type(mant, jnp.float32) - jnp.float32(1.0)


def _blend(x_tile, noise_f32, out_dtype):
    """out = x + noise, in the cheapest dtype that preserves semantics."""
    if out_dtype == jnp.float32:
        return x_tile + noise_f32
    if out_dtype == jnp.bfloat16:
        # Native bf16 VPU on v6e/v7x: cast the noise once, add in bf16 and
        # skip the f32 upcast of x (halves the blend's vreg ops).
        return x_tile + noise_f32.astype(jnp.bfloat16)
    return (x_tile.astype(jnp.float32) + noise_f32).astype(out_dtype)


def _gaussian_noise_kernel(seed_ref, x_ref, o_ref):
    rows, cols = x_ref.shape
    seed_key = seed_ref[0] * jnp.int32(_GOLDEN)
    row_base = pl.program_id(0) * rows      # global row offset of this tile

    scale = jnp.float32(0.1)
    shift = jnp.float32(0.05)
    two_pi = jnp.float32(_TWO_PI)
    # NOTE: on a ragged last tile the pad rows compute garbage noise from
    # garbage x — those lanes are masked on store, never read them.

    if cols % 2 == 0:
        # Box-Muller with BOTH outputs: one PRNG pair drives two elements
        # (cos fills the low lane-half, sin the high lane-half).
        half = cols // 2
        r_iota = lax.broadcasted_iota(jnp.int32, (rows, half), 0)
        c_iota = lax.broadcasted_iota(jnp.int32, (rows, half), 1)
        pair_idx = (row_base + r_iota) * half + c_iota        # GLOBAL pair index
        bits = _lowbias32(pair_idx + seed_key)                # one hash per pair
        u1 = jnp.float32(1.0) - _bits_to_unit(bits)           # (0, 1]: log() safe
        u2 = _bits_to_unit(bits * jnp.int32(_REMIX))          # 1-mul remix stream
        r01 = scale * jnp.sqrt(jnp.float32(-2.0) * jnp.log(u1))   # 0.1 * radius
        theta = two_pi * u2
        n_lo = r01 * jnp.cos(theta) - shift
        n_hi = r01 * jnp.sin(theta) - shift
        o_ref[:, :half] = _blend(x_ref[:, :half], n_lo, o_ref.dtype)
        o_ref[:, half:] = _blend(x_ref[:, half:], n_hi, o_ref.dtype)
    else:
        # Odd trailing dim (rare ragged shapes): one draw per element.
        r_iota = lax.broadcasted_iota(jnp.int32, (rows, cols), 0)
        c_iota = lax.broadcasted_iota(jnp.int32, (rows, cols), 1)
        elem_idx = (row_base + r_iota) * cols + c_iota
        bits = _lowbias32(elem_idx + seed_key)
        u1 = jnp.float32(1.0) - _bits_to_unit(bits)
        u2 = _bits_to_unit(bits * jnp.int32(_REMIX))
        r01 = scale * jnp.sqrt(jnp.float32(-2.0) * jnp.log(u1))
        noise = r01 * jnp.cos(two_pi * u2) - shift
        o_ref[...] = _blend(x_ref[...], noise, o_ref.dtype)


def _round_up(n, m):
    return ((n + m - 1) // m) * m


@functools.partial(jax.jit, static_argnames=("training",))
def gaussian_noise_layer(x, seed, training=True):
    """Pallas implementation of GaussianNoiseLayer.forward (NCHW input)."""
    if not training:
        return x  # eval mode: identity, exactly like the PyTorch module

    orig_shape = x.shape
    total = int(x.size)
    if total == 0:
        return x
    itemsize = x.dtype.itemsize

    # --- exact (no-pad, no-slice) 2-D view: a single HBM read+write pass ---
    if total % 512 == 0:
        cols = 512
    elif total % 256 == 0:
        cols = 256
    else:
        # Ragged element count: keep the trailing dim as the lane axis.
        # Stores may be lane-masked, but we avoid pad/slice extra HBM passes.
        cols = orig_shape[-1] if len(orig_shape) else total
    rows = total // cols
    x2 = x.reshape(rows, cols)

    # --- tile selection ---
    sub = max(8, 32 // itemsize)            # sublane multiple: f32 8, bf16 16, int8 32
    bytes_per_row = max(1, cols * itemsize)
    max_rows = max(sub, (_TARGET_BLOCK_BYTES // bytes_per_row) // sub * sub)
    if rows < 2 * sub:
        tile_rows = rows                    # single full-dim block (always legal)
    else:
        # >= 2 tiles so ("parallel",) can shard across v7x's two TensorCores;
        # cap at ~2 MiB to stay inside v5e's 16 MiB default scoped VMEM.
        tile_rows = min(max_rows, _round_up(pl.cdiv(rows, 2), sub))
    num_tiles = pl.cdiv(rows, tile_rows)

    seed_arr = jnp.reshape(jnp.asarray(seed, dtype=jnp.int32), (1,))

    out2 = pl.pallas_call(
        _gaussian_noise_kernel,
        out_shape=jax.ShapeDtypeStruct((rows, cols), x.dtype),
        grid=(num_tiles,),
        in_specs=[
            pl.BlockSpec(memory_space=pltpu.MemorySpace.SMEM),   # seed scalar
            pl.BlockSpec((tile_rows, cols), lambda i: (i, 0)),   # x row-tile
        ],
        out_specs=pl.BlockSpec((tile_rows, cols), lambda i: (i, 0)),
        # No input_output_aliases: without jit-level donation of x it only
        # forces XLA to insert a protective copy (an extra HBM pass).
        compiler_params=pltpu.CompilerParams(
            dimension_semantics=("parallel",)),   # shard row-tiles across TCs (v7x)
        cost_estimate=pl.CostEstimate(
            flops=15 * total,
            transcendentals=2 * total,
            bytes_accessed=2 * total * itemsize),
    )(seed_arr, x2)

    return out2.reshape(orig_shape)


if __name__ == "__main__":
    key = jax.random.PRNGKey(0)
    # Small NCHW input consistent with the module's usage: (N=2, C=4, H=16, W=16).
    x = jax.random.normal(key, (2, 4, 16, 16), dtype=jnp.float32)

    # Training mode: x + (randn - 0.5) / 10
    y_train = jax.block_until_ready(gaussian_noise_layer(x, seed=42, training=True))
    # Eval mode: identity.
    y_eval = jax.block_until_ready(gaussian_noise_layer(x, seed=42, training=False))

    assert y_train.shape == x.shape and y_train.dtype == x.dtype
    assert bool(jnp.all(jnp.isfinite(y_train)))
    assert bool(jnp.all(y_eval == x))

    # Noise has mean ~ -0.05 and std ~ 0.1; sanity-check the perturbation scale.
    diff = y_train - x
    assert abs(float(jnp.mean(diff)) + 0.05) < 0.02
    assert abs(float(jnp.std(diff)) - 0.1) < 0.02

    # Different seeds give different noise.
    y_alt = jax.block_until_ready(gaussian_noise_layer(x, seed=7, training=True))
    assert bool(jnp.any(y_alt != y_train))

    # Ragged shape exercises the no-pad trailing-dim path (odd cols + partial tile).
    x_odd = jax.random.normal(jax.random.PRNGKey(1), (2, 3, 5, 7), dtype=jnp.float32)
    y_odd = jax.block_until_ready(gaussian_noise_layer(x_odd, seed=3, training=True))
    assert y_odd.shape == x_odd.shape and bool(jnp.all(jnp.isfinite(y_odd)))

    # bf16 exercises the native-dtype blend and 16-row sublane rounding.
    x_bf = jax.random.normal(jax.random.PRNGKey(2), (2, 4, 16, 16), dtype=jnp.bfloat16)
    y_bf = jax.block_until_ready(gaussian_noise_layer(x_bf, seed=5, training=True))
    assert y_bf.shape == x_bf.shape and y_bf.dtype == jnp.bfloat16
    assert bool(jnp.all(jnp.isfinite(y_bf.astype(jnp.float32))))

    print("KERNEL_OK")
</pallas_src>

<mosaic_0001>
module attributes {stable_mosaic.version = 11 : i64} {
  func.func @_gaussian_noise_kernel(%arg0: i32, %arg1: memref<1xi32, #tpu.memory_space<smem>>, %arg2: memref<4x512xf32, #tpu.memory_space<vmem>>, %arg3: memref<4x512xf32, #tpu.memory_space<vmem>>) attributes {dimension_semantics = [#tpu.dimension_semantics<parallel>], iteration_bounds = array<i64: 1>, scalar_prefetch = 0 : i64, scratch_operands = 0 : i64, tpu.core_type = #tpu.core_type<tc>, window_params = [{transform_indices = @transform_0, window_bounds = array<i64: 1>}, {transform_indices = @transform_1, window_bounds = array<i64: 4, 512>}, {transform_indices = @transform_2, window_bounds = array<i64: 4, 512>}]} {
    %c0 = arith.constant 0 : index
    %0 = memref.load %arg1[%c0] : memref<1xi32, #tpu.memory_space<smem>>
    %c-1640531527_i32 = arith.constant -1640531527 : i32
    %1 = arith.muli %0, %c-1640531527_i32 : i32
    %c4_i32 = arith.constant 4 : i32
    %2 = arith.muli %arg0, %c4_i32 : i32
    %3 = tpu.iota {dimensions = array<i32: 0>} : vector<4x256xi32>
    %4 = tpu.iota {dimensions = array<i32: 1>} : vector<4x256xi32>
    %5 = vector.broadcast %2 : i32 to vector<4x256xi32>
    %6 = arith.addi %5, %3 : vector<4x256xi32>
    %c256_i32 = arith.constant 256 : i32
    %7 = vector.broadcast %c256_i32 : i32 to vector<4x256xi32>
    %8 = arith.muli %6, %7 : vector<4x256xi32>
    %9 = arith.addi %8, %4 : vector<4x256xi32>
    %10 = vector.broadcast %1 : i32 to vector<4x256xi32>
    %11 = arith.addi %9, %10 : vector<4x256xi32>
    %c16_i32 = arith.constant 16 : i32
    %12 = vector.broadcast %c16_i32 : i32 to vector<4x256xi32>
    %13 = arith.shrui %11, %12 : vector<4x256xi32>
    %14 = arith.xori %11, %13 : vector<4x256xi32>
    %c2146121005_i32 = arith.constant 2146121005 : i32
    %15 = vector.broadcast %c2146121005_i32 : i32 to vector<4x256xi32>
    %16 = arith.muli %14, %15 : vector<4x256xi32>
    %c15_i32 = arith.constant 15 : i32
    %17 = vector.broadcast %c15_i32 : i32 to vector<4x256xi32>
    %18 = arith.shrui %16, %17 : vector<4x256xi32>
    %19 = arith.xori %16, %18 : vector<4x256xi32>
    %c-2073450869_i32 = arith.constant -2073450869 : i32
    %20 = vector.broadcast %c-2073450869_i32 : i32 to vector<4x256xi32>
    %21 = arith.muli %19, %20 : vector<4x256xi32>
    %c16_i32_0 = arith.constant 16 : i32
    %22 = vector.broadcast %c16_i32_0 : i32 to vector<4x256xi32>
    %23 = arith.shrui %21, %22 : vector<4x256xi32>
    %24 = arith.xori %21, %23 : vector<4x256xi32>
    %c9_i32 = arith.constant 9 : i32
    %25 = vector.broadcast %c9_i32 : i32 to vector<4x256xi32>
    %26 = arith.shrui %24, %25 : vector<4x256xi32>
    %c1065353216_i32 = arith.constant 1065353216 : i32
    %27 = vector.broadcast %c1065353216_i32 : i32 to vector<4x256xi32>
    %28 = arith.ori %26, %27 : vector<4x256xi32>
    %29 = tpu.bitcast %28 : vector<4x256xi32> -> vector<4x256xf32>
    %cst = arith.constant 1.000000e+00 : f32
    %30 = vector.broadcast %cst : f32 to vector<4x256xf32>
    %31 = arith.subf %29, %30 : vector<4x256xf32>
    %cst_1 = arith.constant 1.000000e+00 : f32
    %32 = vector.broadcast %cst_1 : f32 to vector<4x256xf32>
    %33 = arith.subf %32, %31 : vector<4x256xf32>
    %c-2048144789_i32 = arith.constant -2048144789 : i32
    %34 = vector.broadcast %c-2048144789_i32 : i32 to vector<4x256xi32>
    %35 = arith.muli %24, %34 : vector<4x256xi32>
    %c9_i32_2 = arith.constant 9 : i32
    %36 = vector.broadcast %c9_i32_2 : i32 to vector<4x256xi32>
    %37 = arith.shrui %35, %36 : vector<4x256xi32>
    %c1065353216_i32_3 = arith.constant 1065353216 : i32
    %38 = vector.broadcast %c1065353216_i32_3 : i32 to vector<4x256xi32>
    %39 = arith.ori %37, %38 : vector<4x256xi32>
    %40 = tpu.bitcast %39 : vector<4x256xi32> -> vector<4x256xf32>
    %cst_4 = arith.constant 1.000000e+00 : f32
    %41 = vector.broadcast %cst_4 : f32 to vector<4x256xf32>
    %42 = arith.subf %40, %41 : vector<4x256xf32>
    %43 = math.log %33 : vector<4x256xf32>
    %cst_5 = arith.constant -2.000000e+00 : f32
    %44 = vector.broadcast %cst_5 : f32 to vector<4x256xf32>
    %45 = arith.mulf %44, %43 : vector<4x256xf32>
    %46 = math.sqrt %45 : vector<4x256xf32>
    %cst_6 = arith.constant 1.000000e-01 : f32
    %47 = vector.broadcast %cst_6 : f32 to vector<4x256xf32>
    %48 = arith.mulf %47, %46 : vector<4x256xf32>
    %cst_7 = arith.constant 6.28318548 : f32
    %49 = vector.broadcast %cst_7 : f32 to vector<4x256xf32>
    %50 = arith.mulf %49, %42 : vector<4x256xf32>
    %51 = math.cos %50 : vector<4x256xf32>
    %52 = arith.mulf %48, %51 : vector<4x256xf32>
    %cst_8 = arith.constant 5.000000e-02 : f32
    %53 = vector.broadcast %cst_8 : f32 to vector<4x256xf32>
    %54 = arith.subf %52, %53 : vector<4x256xf32>
    %55 = math.sin %50 : vector<4x256xf32>
    %56 = arith.mulf %48, %55 : vector<4x256xf32>
    %cst_9 = arith.constant 5.000000e-02 : f32
    %57 = vector.broadcast %cst_9 : f32 to vector<4x256xf32>
    %58 = arith.subf %56, %57 : vector<4x256xf32>
    %c0_10 = arith.constant 0 : index
    %c0_11 = arith.constant 0 : index
    %59 = vector.load %arg2[%c0_10, %c0_11] : memref<4x512xf32, #tpu.memory_space<vmem>>, vector<4x256xf32>
    %60 = arith.addf %59, %54 : vector<4x256xf32>
    %c0_12 = arith.constant 0 : index
    %c0_13 = arith.constant 0 : index
    %61 = vector.load %arg3[%c0_12, %c0_13] : memref<4x512xf32, #tpu.memory_space<vmem>>, vector<4x256xf32>
    tpu.vector_store %arg3[%c0_12, %c0_13], %60 {strides = array<i32>} : memref<4x512xf32, #tpu.memory_space<vmem>>, vector<4x256xf32>,
    %c0_14 = arith.constant 0 : index
    %c256 = arith.constant 256 : index
    %62 = vector.load %arg2[%c0_14, %c256] : memref<4x512xf32, #tpu.memory_space<vmem>>, vector<4x256xf32>
    %63 = arith.addf %62, %58 : vector<4x256xf32>
    %c0_15 = arith.constant 0 : index
    %c256_16 = arith.constant 256 : index
    %64 = vector.load %arg3[%c0_15, %c256_16] : memref<4x512xf32, #tpu.memory_space<vmem>>, vector<4x256xf32>
    tpu.vector_store %arg3[%c0_15, %c256_16], %63 {strides = array<i32>} : memref<4x512xf32, #tpu.memory_space<vmem>>, vector<4x256xf32>,
    return
  }
  func.func @transform_0(%arg0: i32) -> i32 {
    %c0_i32 = arith.constant 0 : i32
    %c0_i32_0 = arith.constant 0 : i32
    return %c0_i32 : i32
  }
  func.func @transform_1(%arg0: i32) -> (i32, i32) {
    %c0_i32 = arith.constant 0 : i32
    %c0_i32_0 = arith.constant 0 : i32
    return %arg0, %c0_i32 : i32, i32
  }
  func.func @transform_2(%arg0: i32) -> (i32, i32) {
    %c0_i32 = arith.constant 0 : i32
    %c0_i32_0 = arith.constant 0 : i32
    return %arg0, %c0_i32 : i32, i32
  }
}

</mosaic_0001>

<llo_original>
// kernel: gaussian_noise_layer.1
$region0: #{gaussian_noise_layer.1}
  #allocation0 [shape = 'u32[]', space=smem, size = 0x4, offset = 0x4, fixed_abs, tag = 'smem constant byte address 0x4 - core index']
  #allocation1 [shape = 'u32[144,128]{1,0:T(1,128)}', space=vmem, size = 0x12000, scoped, tag = 'internal scratch']
  #allocation2 [shape = 's32[1]{0:T(128)S(6)}', space=smem, size = 0x200, scoped, tag = 'scoped memory for gaussian_noise_layer.1']
  %s0 = inlined_call_operand.<no memory space> [shape: s32[1], index: 0, kind: input, shape index: {}]
  %s1 = inlined_call_operand.vmem [shape: f32[4,512], index: 1, kind: input, shape index: {}]
  %s2 = inlined_call_operand.vmem [shape: f32[4,512], index: 2, kind: output, shape index: {}]
  %s3 = sld [smem:[#allocation0]]
  $region18: #{gaussian_noise_layer.1} parent=0
    _
  %s5 = ssub.s32 1, %s3
  %s6 = scalar_select 0, %s5, %s3
  %7 = sst [smem:[#allocation2]] %s0
  // Predicated region
  $region2: #{gaussian_noise_layer.1} parent=0 // pred_check
    _
  $region3: #{gaussian_noise_layer.1} parent=0 // pred_check_branch
    %9 = sbr.rel (0) target = $region5
  $region4: #{gaussian_noise_layer.1} parent=0 // pred_region
    _
  $region5: #{gaussian_noise_layer.1} parent=0 // pred_fallthru
    _
  // Predicated region
  $region6: #{gaussian_noise_layer.1} parent=0 // pred_check
    _
  $region7: #{gaussian_noise_layer.1} parent=0 // pred_check_branch
    %11 = sbr.rel (0) target = $region9
  $region8: #{gaussian_noise_layer.1} parent=0 // pred_region
    _
  $region9: #{gaussian_noise_layer.1} parent=0 // pred_fallthru
    _
  %s12 = sld [smem:[#allocation2]]
  %s13 = smul.u32 %s12, 2654435769
  %s14 = smul.u32 0, 4
  %v15 = vlaneseq
  %v16 = vshrl.u32 %v15, 7
  %v17 = vlaneseq
  %v18 = vand.u32 %v17, 127
  %v19 = vadd.s32 %v18, 128
  %v20 = vstv %s14
  %v21 = vadd.s32 %v20, %v16
  %v22 = vmul.u32 %v21, 256
  %v23 = vadd.s32 %v22, %v18
  %v24 = vadd.s32 %v22, %v19
  %v25 = vstv %s13
  %v26 = vadd.s32 %v23, %v25
  %v27 = vadd.s32 %v24, %v25
  %v28 = vshrl.u32 %v26, 16
  %v29 = vshrl.u32 %v27, 16
  %v30 = vxor.u32 %v26, %v28
  %v31 = vxor.u32 %v27, %v29
  %v32 = vmul.u32 %v30, 2146121005
  %v33 = vmul.u32 %v31, 2146121005
  %v34 = vshrl.u32 %v32, 15
  %v35 = vshrl.u32 %v33, 15
  %v36 = vxor.u32 %v32, %v34
  %v37 = vxor.u32 %v33, %v35
  %v38 = vmul.u32 %v36, 2221516427
  %v39 = vmul.u32 %v37, 2221516427
  %v40 = vshrl.u32 %v38, 16
  %v41 = vshrl.u32 %v39, 16
  %v42 = vxor.u32 %v38, %v40
  %v43 = vxor.u32 %v39, %v41
  %v44 = vshrl.u32 %v42, 9
  %v45 = vshrl.u32 %v43, 9
  %v46 = vor.u32 %v44, 1065353216
  %v47 = vor.u32 %v45, 1065353216
  %v50 = vsub.f32 %v46, 1.0
  %v51 = vsub.f32 %v47, 1.0
  %v52 = vsub.f32 1.0, %v50
  %v53 = vsub.f32 1.0, %v51
  %v54 = vmul.u32 %v42, 2246822507
  %v55 = vmul.u32 %v43, 2246822507
  %v56 = vshrl.u32 %v54, 9
  %v57 = vshrl.u32 %v55, 9
  %v58 = vor.u32 %v56, 1065353216
  %v59 = vor.u32 %v57, 1065353216
  %v62 = vsub.f32 %v58, 1.0
  %v63 = vsub.f32 %v59, 1.0
  %v64 = vlog2.pop %v52
  %v65 = vmul.f32 %v64, 0.6931472
  %v66 = vlog2.pop %v53
  %v67 = vmul.f32 %v66, 0.6931472
  %v68 = vmul.f32 %v65, -2.0
  %v69 = vmul.f32 %v67, -2.0
  %v70 = vrsqrt.pop %v68
  %v71 = vmul.f32 %v68, %v70
  %vm72 = vcmp.eq.f32.partialorder %v68, inf
  %v73 = vsel %vm72, %v68, %v71
  %vm74 = vcmp.eq.f32.partialorder %v68, 0.0
  %v75 = vand.u32 %v68, 2147483648
  %v76 = vsel %vm74, %v75, %v73
  %v77 = vrsqrt.pop %v69
  %v78 = vmul.f32 %v69, %v77
  %vm79 = vcmp.eq.f32.partialorder %v69, inf
  %v80 = vsel %vm79, %v69, %v78
  %vm81 = vcmp.eq.f32.partialorder %v69, 0.0
  %v82 = vand.u32 %v69, 2147483648
  %v83 = vsel %vm81, %v82, %v80
  %v84 = vmul.f32 %v76, 0.1
  %v85 = vmul.f32 %v83, 0.1
  %v86 = vmul.f32 %v62, 6.2831855
  %v87 = vmul.f32 %v63, 6.2831855
  %v88 = vand.u32 2147483647, %v86
  %vm89 = vcmp.le.f32.partialorder %v88, 0.7853982
  %vm90 = vcmp.lt.s32.totalorder %v86, 0
  %v91 = vand.u32 %v86, 2139095040
  %v92 = vshrl.u32 %v91, 23
  %v93 = vsub.s32 %v92, 127
  %v94 = vand.u32 2147483647, %v86
  %v95 = vand.u32 %v94, 8388607
  %v96 = vor.u32 %v95, 8388608
  %v97 = vsub.s32 0, %v96
  %v98 = vadd.s32 %v93, 1
  %vm99 = vcmp.gt.s32.totalorder %v98, 0
  %v100 = vsel %vm99, %v98, 0
  %v101 = vshrl.u32 %v100, 5
  %v102 = vand.u32 %v100, 31
  %v103 = vsub.s32 32, %v102
  %v104 = vshrl.u32 683565275, %v103
  %v105 = vshll.u32 683565275, %v102
  %v106 = vshrl.u32 2475754826, %v103
  %v107 = vor.u32 %v105, %v106
  %v108 = vshll.u32 2475754826, %v102
  %v109 = vshrl.u32 2131351028, %v103
  %v110 = vor.u32 %v108, %v109
  %v111 = vshll.u32 2131351028, %v102
  %v112 = vshrl.u32 2102212464, %v103
  %v113 = vor.u32 %v111, %v112
  %v114 = vshll.u32 2102212464, %v102
  %v115 = vshrl.u32 920167782, %v103
  %v116 = vor.u32 %v114, %v115
  %v117 = vshll.u32 920167782, %v102
  %v118 = vshrl.u32 1326507024, %v103
  %v119 = vor.u32 %v117, %v118
  %vm120 = vcmp.lt.s32.totalorder %v101, 1
  %vm121 = vcmp.lt.s32.totalorder %v101, 2
  %vm122 = vcmp.lt.s32.totalorder %v101, 3
  %vm123 = vcmp.lt.s32.totalorder %v101, 4
  %v124 = vsel %vm120, %v104, %v107
  %v125 = vsel %vm123, %v113, 2102212464
  %v126 = vsel %vm122, %v110, %v125
  %v127 = vsel %vm121, %v124, %v126
  %v128 = vsel %vm120, %v107, %v110
  %v129 = vsel %vm123, %v116, 920167782
  %v130 = vsel %vm122, %v113, %v129
  %v131 = vsel %vm121, %v128, %v130
  %v132 = vsel %vm120, %v110, %v113
  %v133 = vsel %vm123, %v119, 1326507024
  %v134 = vsel %vm122, %v116, %v133
  %v135 = vsel %vm121, %v132, %v134
  %v136 = vshll.u32 %v96, 8
  %v137 = vmul.u32.u64.compose %v136, %v135
  %v138 = vextract.low.u32 %v137
  %v139 = vextract.high.u32 %v137
  %v140 = vmul.u32.u64.compose %v136, %v131
  %v141 = vextract.low.u32 %v140
  %v142 = vextract.high.u32 %v140
  %v143 = vmul.u32 %v136, %v127
  %v144 = vadd.s32 %v139, %v141
  %vm145 = vc.u32 %v139, %v141
  %v146 = vadd.s32 %v142, 1
  %v147 = vsel %vm145, %v146, %v142
  %v148 = vadd.s32 %v143, %v147
  %v149 = vadd.s32 %v148, 536870912
  %v150 = vshrl.u32 %v149, 30
  %v151 = vshll.u32 %v150, 30
  %v152 = vsub.s32 %v148, %v151
  %vm153 = vcmp.lt.s32.totalorder %v152, 0
  %v154 = vsub.s32 0, %v152
  %v155 = vsel %vm153, %v154, %v152
  %v156 = vclz %v155
  %v157 = vsub.s32 %v156, 2
  %vm158 = vcmp.gt.s32.totalorder 0, %v157
  %v159 = vsel %vm158, 0, %v157
  %v160 = vsub.s32 32, %v159
  %v161 = vshll.u32 %v152, %v159
  %v162 = vshrl.u32 %v144, %v160
  %v163 = vor.u32 %v161, %v162
  %v164 = vsub.s32 4294967266, %v159
  %v165 = vadd.s32 %v164, 127
  %v166 = vshll.u32 %v165, 23
  %v167 = vor.u32 4788187, %v166
  %v168 = vand.u32 2147483647, %v167
  %v170 = vcvt.s32.f32 %v163
  %v171 = vmul.f32 %v170, %v168
  %v172 = vxor.u32 %v171, 2147483648
  %v173 = vsel %vm90, %v172, %v171
  %v174 = vsub.s32 4, %v150
  %v175 = vsel %vm90, %v174, %v150
  %v176 = vsel %vm89, %v86, %v173
  %v177 = vsel %vm89, 0, %v175
  %v178 = vcosq.f32.pop %v176
  %v179 = vsinq.f32.pop %v176
  %vm180 = vweird.f32 %v86
  %v181 = vand.u32 %v177, 3
  %vm182 = vcmp.lt.s32.totalorder %v181, 2
  %vm183 = vcmp.eq.s32.totalorder %v181, 0
  %v184 = vxor.u32 %v179, 2147483648
  %v185 = vsel %vm183, %v178, %v184
  %vm186 = vcmp.eq.s32.totalorder %v181, 2
  %v187 = vxor.u32 %v178, 2147483648
  %v188 = vsel %vm186, %v187, %v179
  %v189 = vsel %vm182, %v185, %v188
  %v190 = vsel %vm180, nan, %v189
  %v191 = vand.u32 2147483647, %v87
  %vm192 = vcmp.le.f32.partialorder %v191, 0.7853982
  %vm193 = vcmp.lt.s32.totalorder %v87, 0
  %v194 = vand.u32 %v87, 2139095040
  %v195 = vshrl.u32 %v194, 23
  %v196 = vsub.s32 %v195, 127
  %v197 = vand.u32 2147483647, %v87
  %v198 = vand.u32 %v197, 8388607
  %v199 = vor.u32 %v198, 8388608
  %v200 = vsub.s32 0, %v199
  %v201 = vadd.s32 %v196, 1
  %vm202 = vcmp.gt.s32.totalorder %v201, 0
  %v203 = vsel %vm202, %v201, 0
  %v204 = vshrl.u32 %v203, 5
  %v205 = vand.u32 %v203, 31
  %v206 = vsub.s32 32, %v205
  %v207 = vshrl.u32 683565275, %v206
  %v208 = vshll.u32 683565275, %v205
  %v209 = vshrl.u32 2475754826, %v206
  %v210 = vor.u32 %v208, %v209
  %v211 = vshll.u32 2475754826, %v205
  %v212 = vshrl.u32 2131351028, %v206
  %v213 = vor.u32 %v211, %v212
  %v214 = vshll.u32 2131351028, %v205
  %v215 = vshrl.u32 2102212464, %v206
  %v216 = vor.u32 %v214, %v215
  %v217 = vshll.u32 2102212464, %v205
  %v218 = vshrl.u32 920167782, %v206
  %v219 = vor.u32 %v217, %v218
  %v220 = vshll.u32 920167782, %v205
  %v221 = vshrl.u32 1326507024, %v206
  %v222 = vor.u32 %v220, %v221
  %vm223 = vcmp.lt.s32.totalorder %v204, 1
  %vm224 = vcmp.lt.s32.totalorder %v204, 2
  %vm225 = vcmp.lt.s32.totalorder %v204, 3
  %vm226 = vcmp.lt.s32.totalorder %v204, 4
  %v227 = vsel %vm223, %v207, %v210
  %v228 = vsel %vm226, %v216, 2102212464
  %v229 = vsel %vm225, %v213, %v228
  %v230 = vsel %vm224, %v227, %v229
  %v231 = vsel %vm223, %v210, %v213
  %v232 = vsel %vm226, %v219, 920167782
  %v233 = vsel %vm225, %v216, %v232
  %v234 = vsel %vm224, %v231, %v233
  %v235 = vsel %vm223, %v213, %v216
  %v236 = vsel %vm226, %v222, 1326507024
  %v237 = vsel %vm225, %v219, %v236
  %v238 = vsel %vm224, %v235, %v237
  %v239 = vshll.u32 %v199, 8
  %v240 = vmul.u32.u64.compose %v239, %v238
  %v241 = vextract.low.u32 %v240
  %v242 = vextract.high.u32 %v240
  %v243 = vmul.u32.u64.compose %v239, %v234
  %v244 = vextract.low.u32 %v243
  %v245 = vextract.high.u32 %v243
  %v246 = vmul.u32 %v239, %v230
  %v247 = vadd.s32 %v242, %v244
  %vm248 = vc.u32 %v242, %v244
  %v249 = vadd.s32 %v245, 1
  %v250 = vsel %vm248, %v249, %v245
  %v251 = vadd.s32 %v246, %v250
  %v252 = vadd.s32 %v251, 536870912
  %v253 = vshrl.u32 %v252, 30
  %v254 = vshll.u32 %v253, 30
  %v255 = vsub.s32 %v251, %v254
  %vm256 = vcmp.lt.s32.totalorder %v255, 0
  %v257 = vsub.s32 0, %v255
  %v258 = vsel %vm256, %v257, %v255
  %v259 = vclz %v258
  %v260 = vsub.s32 %v259, 2
  %vm261 = vcmp.gt.s32.totalorder 0, %v260
  %v262 = vsel %vm261, 0, %v260
  %v263 = vsub.s32 32, %v262
  %v264 = vshll.u32 %v255, %v262
  %v265 = vshrl.u32 %v247, %v263
  %v266 = vor.u32 %v264, %v265
  %v267 = vsub.s32 4294967266, %v262
  %v268 = vadd.s32 %v267, 127
  %v269 = vshll.u32 %v268, 23
  %v270 = vor.u32 4788187, %v269
  %v271 = vand.u32 2147483647, %v270
  %v273 = vcvt.s32.f32 %v266
  %v274 = vmul.f32 %v273, %v271
  %v275 = vxor.u32 %v274, 2147483648
  %v276 = vsel %vm193, %v275, %v274
  %v277 = vsub.s32 4, %v253
  %v278 = vsel %vm193, %v277, %v253
  %v279 = vsel %vm192, %v87, %v276
  %v280 = vsel %vm192, 0, %v278
  %v281 = vcosq.f32.pop %v279
  %v282 = vsinq.f32.pop %v279
  %vm283 = vweird.f32 %v87
  %v284 = vand.u32 %v280, 3
  %vm285 = vcmp.lt.s32.totalorder %v284, 2
  %vm286 = vcmp.eq.s32.totalorder %v284, 0
  %v287 = vxor.u32 %v282, 2147483648
  %v288 = vsel %vm286, %v281, %v287
  %vm289 = vcmp.eq.s32.totalorder %v284, 2
  %v290 = vxor.u32 %v281, 2147483648
  %v291 = vsel %vm289, %v290, %v282
  %v292 = vsel %vm285, %v288, %v291
  %v293 = vsel %vm283, nan, %v292
  %v294 = vmul.f32 %v84, %v190
  %v295 = vmul.f32 %v85, %v293
  %v296 = vsub.f32 %v294, 0.05
  %v297 = vsub.f32 %v295, 0.05
  %v298 = vand.u32 2147483647, %v86
  %vm299 = vcmp.le.f32.partialorder %v298, 0.7853982
  %vm300 = vcmp.lt.s32.totalorder %v86, 0
  %v301 = vand.u32 %v86, 2139095040
  %v302 = vshrl.u32 %v301, 23
  %v303 = vsub.s32 %v302, 127
  %v304 = vand.u32 2147483647, %v86
  %v305 = vand.u32 %v304, 8388607
  %v306 = vor.u32 %v305, 8388608
  %v307 = vsub.s32 0, %v306
  %v308 = vadd.s32 %v303, 1
  %vm309 = vcmp.gt.s32.totalorder %v308, 0
  %v310 = vsel %vm309, %v308, 0
  %v311 = vshrl.u32 %v310, 5
  %v312 = vand.u32 %v310, 31
  %v313 = vsub.s32 32, %v312
  %v314 = vshrl.u32 683565275, %v313
  %v315 = vshll.u32 683565275, %v312
  %v316 = vshrl.u32 2475754826, %v313
  %v317 = vor.u32 %v315, %v316
  %v318 = vshll.u32 2475754826, %v312
  %v319 = vshrl.u32 2131351028, %v313
  %v320 = vor.u32 %v318, %v319
  %v321 = vshll.u32 2131351028, %v312
  %v322 = vshrl.u32 2102212464, %v313
  %v323 = vor.u32 %v321, %v322
  %v324 = vshll.u32 2102212464, %v312
  %v325 = vshrl.u32 920167782, %v313
  %v326 = vor.u32 %v324, %v325
  %v327 = vshll.u32 920167782, %v312
  %v328 = vshrl.u32 1326507024, %v313
  %v329 = vor.u32 %v327, %v328
  %vm330 = vcmp.lt.s32.totalorder %v311, 1
  %vm331 = vcmp.lt.s32.totalorder %v311, 2
  %vm332 = vcmp.lt.s32.totalorder %v311, 3
  %vm333 = vcmp.lt.s32.totalorder %v311, 4
  %v334 = vsel %vm330, %v314, %v317
  %v335 = vsel %vm333, %v323, 2102212464
  %v336 = vsel %vm332, %v320, %v335
  %v337 = vsel %vm331, %v334, %v336
  %v338 = vsel %vm330, %v317, %v320
  %v339 = vsel %vm333, %v326, 920167782
  %v340 = vsel %vm332, %v323, %v339
  %v341 = vsel %vm331, %v338, %v340
  %v342 = vsel %vm330, %v320, %v323
  %v343 = vsel %vm333, %v329, 1326507024
  %v344 = vsel %vm332, %v326, %v343
  %v345 = vsel %vm331, %v342, %v344
  %v346 = vshll.u32 %v306, 8
  %v347 = vmul.u32.u64.compose %v346, %v345
  %v348 = vextract.low.u32 %v347
  %v349 = vextract.high.u32 %v347
  %v350 = vmul.u32.u64.compose %v346, %v341
  %v351 = vextract.low.u32 %v350
  %v352 = vextract.high.u32 %v350
  %v353 = vmul.u32 %v346, %v337
  %v354 = vadd.s32 %v349, %v351
  %vm355 = vc.u32 %v349, %v351
  %v356 = vadd.s32 %v352, 1
  %v357 = vsel %vm355, %v356, %v352
  %v358 = vadd.s32 %v353, %v357
  %v359 = vadd.s32 %v358, 536870912
  %v360 = vshrl.u32 %v359, 30
  %v361 = vshll.u32 %v360, 30
  %v362 = vsub.s32 %v358, %v361
  %vm363 = vcmp.lt.s32.totalorder %v362, 0
  %v364 = vsub.s32 0, %v362
  %v365 = vsel %vm363, %v364, %v362
  %v366 = vclz %v365
  %v367 = vsub.s32 %v366, 2
  %vm368 = vcmp.gt.s32.totalorder 0, %v367
  %v369 = vsel %vm368, 0, %v367
  %v370 = vsub.s32 32, %v369
  %v371 = vshll.u32 %v362, %v369
  %v372 = vshrl.u32 %v354, %v370
  %v373 = vor.u32 %v371, %v372
  %v374 = vsub.s32 4294967266, %v369
  %v375 = vadd.s32 %v374, 127
  %v376 = vshll.u32 %v375, 23
  %v377 = vor.u32 4788187, %v376
  %v378 = vand.u32 2147483647, %v377
  %v380 = vcvt.s32.f32 %v373
  %v381 = vmul.f32 %v380, %v378
  %v382 = vxor.u32 %v381, 2147483648
  %v383 = vsel %vm300, %v382, %v381
  %v384 = vsub.s32 4, %v360
  %v385 = vsel %vm300, %v384, %v360
  %v386 = vsel %vm299, %v86, %v383
  %v387 = vsel %vm299, 0, %v385
  %v388 = vcosq.f32.pop %v386
  %v389 = vsinq.f32.pop %v386
  %vm390 = vweird.f32 %v86
  %v391 = vadd.s32 %v387, 3
  %v392 = vand.u32 %v391, 3
  %vm393 = vcmp.lt.s32.totalorder %v392, 2
  %vm394 = vcmp.eq.s32.totalorder %v392, 0
  %v395 = vxor.u32 %v389, 2147483648
  %v396 = vsel %vm394, %v388, %v395
  %vm397 = vcmp.eq.s32.totalorder %v392, 2
  %v398 = vxor.u32 %v388, 2147483648
  %v399 = vsel %vm397, %v398, %v389
  %v400 = vsel %vm393, %v396, %v399
  %v401 = vsel %vm390, nan, %v400
  %v402 = vand.u32 2147483647, %v87
  %vm403 = vcmp.le.f32.partialorder %v402, 0.7853982
  %vm404 = vcmp.lt.s32.totalorder %v87, 0
  %v405 = vand.u32 %v87, 2139095040
  %v406 = vshrl.u32 %v405, 23
  %v407 = vsub.s32 %v406, 127
  %v408 = vand.u32 2147483647, %v87
  %v409 = vand.u32 %v408, 8388607
  %v410 = vor.u32 %v409, 8388608
  %v411 = vsub.s32 0, %v410
  %v412 = vadd.s32 %v407, 1
  %vm413 = vcmp.gt.s32.totalorder %v412, 0
  %v414 = vsel %vm413, %v412, 0
  %v415 = vshrl.u32 %v414, 5
  %v416 = vand.u32 %v414, 31
  %v417 = vsub.s32 32, %v416
  %v418 = vshrl.u32 683565275, %v417
  %v419 = vshll.u32 683565275, %v416
  %v420 = vshrl.u32 2475754826, %v417
  %v421 = vor.u32 %v419, %v420
  %v422 = vshll.u32 2475754826, %v416
  %v423 = vshrl.u32 2131351028, %v417
  %v424 = vor.u32 %v422, %v423
  %v425 = vshll.u32 2131351028, %v416
  %v426 = vshrl.u32 2102212464, %v417
  %v427 = vor.u32 %v425, %v426
  %v428 = vshll.u32 2102212464, %v416
  %v429 = vshrl.u32 920167782, %v417
  %v430 = vor.u32 %v428, %v429
  %v431 = vshll.u32 920167782, %v416
  %v432 = vshrl.u32 1326507024, %v417
  %v433 = vor.u32 %v431, %v432
  %vm434 = vcmp.lt.s32.totalorder %v415, 1
  %vm435 = vcmp.lt.s32.totalorder %v415, 2
  %vm436 = vcmp.lt.s32.totalorder %v415, 3
  %vm437 = vcmp.lt.s32.totalorder %v415, 4
  %v438 = vsel %vm434, %v418, %v421
  %v439 = vsel %vm437, %v427, 2102212464
  %v440 = vsel %vm436, %v424, %v439
  %v441 = vsel %vm435, %v438, %v440
  %v442 = vsel %vm434, %v421, %v424
  %v443 = vsel %vm437, %v430, 920167782
  %v444 = vsel %vm436, %v427, %v443
  %v445 = vsel %vm435, %v442, %v444
  %v446 = vsel %vm434, %v424, %v427
  %v447 = vsel %vm437, %v433, 1326507024
  %v448 = vsel %vm436, %v430, %v447
  %v449 = vsel %vm435, %v446, %v448
  %v450 = vshll.u32 %v410, 8
  %v451 = vmul.u32.u64.compose %v450, %v449
  %v452 = vextract.low.u32 %v451
  %v453 = vextract.high.u32 %v451
  %v454 = vmul.u32.u64.compose %v450, %v445
  %v455 = vextract.low.u32 %v454
  %v456 = vextract.high.u32 %v454
  %v457 = vmul.u32 %v450, %v441
  %v458 = vadd.s32 %v453, %v455
  %vm459 = vc.u32 %v453, %v455
  %v460 = vadd.s32 %v456, 1
  %v461 = vsel %vm459, %v460, %v456
  %v462 = vadd.s32 %v457, %v461
  %v463 = vadd.s32 %v462, 536870912
  %v464 = vshrl.u32 %v463, 30
  %v465 = vshll.u32 %v464, 30
  %v466 = vsub.s32 %v462, %v465
  %vm467 = vcmp.lt.s32.totalorder %v466, 0
  %v468 = vsub.s32 0, %v466
  %v469 = vsel %vm467, %v468, %v466
  %v470 = vclz %v469
  %v471 = vsub.s32 %v470, 2
  %vm472 = vcmp.gt.s32.totalorder 0, %v471
  %v473 = vsel %vm472, 0, %v471
  %v474 = vsub.s32 32, %v473
  %v475 = vshll.u32 %v466, %v473
  %v476 = vshrl.u32 %v458, %v474
  %v477 = vor.u32 %v475, %v476
  %v478 = vsub.s32 4294967266, %v473
  %v479 = vadd.s32 %v478, 127
  %v480 = vshll.u32 %v479, 23
  %v481 = vor.u32 4788187, %v480
  %v482 = vand.u32 2147483647, %v481
  %v484 = vcvt.s32.f32 %v477
  %v485 = vmul.f32 %v484, %v482
  %v486 = vxor.u32 %v485, 2147483648
  %v487 = vsel %vm404, %v486, %v485
  %v488 = vsub.s32 4, %v464
  %v489 = vsel %vm404, %v488, %v464
  %v490 = vsel %vm403, %v87, %v487
  %v491 = vsel %vm403, 0, %v489
  %v492 = vcosq.f32.pop %v490
  %v493 = vsinq.f32.pop %v490
  %vm494 = vweird.f32 %v87
  %v495 = vadd.s32 %v491, 3
  %v496 = vand.u32 %v495, 3
  %vm497 = vcmp.lt.s32.totalorder %v496, 2
  %vm498 = vcmp.eq.s32.totalorder %v496, 0
  %v499 = vxor.u32 %v493, 2147483648
  %v500 = vsel %vm498, %v492, %v499
  %vm501 = vcmp.eq.s32.totalorder %v496, 2
  %v502 = vxor.u32 %v492, 2147483648
  %v503 = vsel %vm501, %v502, %v493
  %v504 = vsel %vm497, %v500, %v503
  %v505 = vsel %vm494, nan, %v504
  %v506 = vmul.f32 %v84, %v401
  %v507 = vmul.f32 %v85, %v505
  %v508 = vsub.f32 %v506, 0.05
  %v509 = vsub.f32 %v507, 0.05
  %v510 = vld [vmem:[%s1] sm:$0xff]
  %v513 = vcombine.low %v296, %v297
  %v515 = vadd.f32 %v510, %v513
  %516 = vst [vmem:[%s2] sm:$0xff] %v515
  %v517 = vld [vmem:[%s1 + $0x8] sm:$0xff]
  %v520 = vcombine.low %v508, %v509
  %v522 = vadd.f32 %v517, %v520
  %523 = vst [vmem:[%s2 + $0x8] sm:$0xff] %v522
  // Predicated region
  $region10: #{gaussian_noise_layer.1} parent=0 // pred_check
    _
  $region11: #{gaussian_noise_layer.1} parent=0 // pred_check_branch
    %525 = sbr.rel (0) target = $region13
  $region12: #{gaussian_noise_layer.1} parent=0 // pred_region
    _
  $region13: #{gaussian_noise_layer.1} parent=0 // pred_fallthru
    _
  // Predicated region
  $region14: #{gaussian_noise_layer.1} parent=0 // pred_check
    _
  $region15: #{gaussian_noise_layer.1} parent=0 // pred_check_branch
    %527 = sbr.rel (0) target = $region17
  $region16: #{gaussian_noise_layer.1} parent=0 // pred_region
    _
  $region17: #{gaussian_noise_layer.1} parent=0 // pred_fallthru
    _

</llo_original>
